<compile_context>
chip_gen: v6e
topology: v6e:2x2x1
jax: 0.10.0
libtpu: 0.0.40
codegen_flags: <defaults>
</compile_context>

<pallas_src>
import jax
import jax.numpy as jnp
from jax.experimental import pallas as pl
from jax.experimental.pallas import tpu as pltpu

P = 0.8            # dropout probability of ConsistentMCDropout
NUM_MASKS = 3      # number of pre-generated consistent masks
D_IN, D_H, D_OUT = 784, 256, 10


# ----------------------------------------------------------------------------
# Fused Pallas kernel: fc1 + bias + relu + fc2(with folded mask) + log_softmax
# ----------------------------------------------------------------------------
def _net_kernel(x_ref, w1_ref, b1_ref, w2_ref, b2_ref, o_ref):
    cdt = w1_ref.dtype                     # matmul operand dtype (bf16 or f32)
    prec = jax.lax.Precision.HIGHEST if cdt == jnp.float32 else None

    # fc1 + bias + relu   (mask is pre-folded into w2 by the wrapper)
    h = jnp.dot(x_ref[...].astype(cdt), w1_ref[...],
                preferred_element_type=jnp.float32, precision=prec)
    h = jnp.maximum(h + b1_ref[...], 0.0)

    # fc2 (mask/(1-p) already folded into w2) + bias
    logits = jnp.dot(h.astype(cdt), w2_ref[...],
                     preferred_element_type=jnp.float32, precision=prec)
    logits = logits + b2_ref[...]

    # log_softmax (max-subtracted, f32)
    mx = jnp.max(logits, axis=-1, keepdims=True)
    s = logits - mx
    lse = jnp.log(jnp.sum(jnp.exp(s), axis=-1, keepdims=True))
    o_ref[...] = s - lse


# ----------------------------------------------------------------------------
# One-time parameter relayout (hoisted out of the per-call forward).
# Torch Linear stores W as (out, in) -> transpose to (in, out), cast once.
# ----------------------------------------------------------------------------
def prepare_params(params, matmul_dtype=jnp.bfloat16):
    d_h = params['fc1_b'].shape[0]
    d_out = params['fc2_b'].shape[0]
    return {
        'w1': params['fc1_w'].T.astype(matmul_dtype),            # (784, 256)
        'b1': params['fc1_b'].reshape(1, d_h).astype(jnp.float32),
        'w2': params['fc2_w'].T.astype(jnp.float32),              # (256, 10), kept f32
        'b2': params['fc2_b'].reshape(1, d_out).astype(jnp.float32),
        # pre-scaled consistent dropout masks: mask / (1 - p)
        'masks_scaled': (params['masks'] / (1.0 - P)).astype(jnp.float32),
    }


def net_forward_pallas(prepared, x, mask, *, block_b=1024):
    """Forward pass matching PyTorch Net.forward semantics.

    x is used in its native dtype (f32 or bf16); matmul operand dtype is taken
    from prepared['w1'].dtype (set in prepare_params).
    """
    n, d_in = x.shape
    d_h = prepared['b1'].shape[1]
    d_out = prepared['b2'].shape[1]
    num_masks = prepared['masks_scaled'].shape[0]
    cdt = prepared['w1'].dtype

    # mask-index clipping (same as torch forward), traced -> no recompile
    idx = jnp.clip(jnp.asarray(mask, jnp.int32), 0, num_masks - 1)
    m = jnp.take(prepared['masks_scaled'], idx, axis=0)          # (256,)
    # fold post-ReLU mask into fc2:  relu(h)*m @ W2 == relu(h) @ (m[:,None]*W2)
    w2 = (m[:, None] * prepared['w2']).astype(cdt)               # (256, 10)

    # batch tiling: single full-batch block for small n, else aligned big tiles
    if n <= block_b:
        tb = n                                  # full batch dim -> always legal
    else:
        tb = max(32, (block_b // 32) * 32)      # multiple of 32 (f32/bf16/int8 sublane pack)
    grid = (pl.cdiv(n, tb),)                    # ragged last tile: OOB rows masked on store

    out = pl.pallas_call(
        _net_kernel,
        out_shape=jax.ShapeDtypeStruct((n, d_out), jnp.float32),
        grid=grid,
        in_specs=[
            pl.BlockSpec((tb, d_in), lambda i: (i, 0)),      # x tile (native dtype)
            pl.BlockSpec((d_in, d_h), lambda i: (0, 0)),     # w1 (resident)
            pl.BlockSpec((1, d_h), lambda i: (0, 0)),        # b1
            pl.BlockSpec((d_h, d_out), lambda i: (0, 0)),    # w2 (mask folded in)
            pl.BlockSpec((1, d_out), lambda i: (0, 0)),      # b2
        ],
        out_specs=pl.BlockSpec((tb, d_out), lambda i: (i, 0)),
        compiler_params=pltpu.CompilerParams(
            dimension_semantics=("parallel",)),
    )(x, prepared['w1'], prepared['b1'], w2, prepared['b2'])
    return out


# ----------------------------------------------------------------------------
# Pure-JAX reference (mirrors the PyTorch forward exactly: mask applied to h)
# ----------------------------------------------------------------------------
def net_forward_reference(params, x, mask, *, matmul_dtype=jnp.float32):
    num_masks = params['masks'].shape[0]
    idx = jnp.clip(jnp.asarray(mask, jnp.int32), 0, num_masks - 1)
    prec = jax.lax.Precision.HIGHEST if matmul_dtype == jnp.float32 else None

    w1 = params['fc1_w'].T.astype(matmul_dtype)
    w2 = params['fc2_w'].T.astype(matmul_dtype)
    h = jnp.dot(x.astype(matmul_dtype), w1,
                preferred_element_type=jnp.float32, precision=prec)
    h = jax.nn.relu(h + params['fc1_b'])
    mvec = jnp.take(params['masks'], idx, axis=0)
    h = h * mvec[None, :] / (1.0 - P)
    logits = jnp.dot(h.astype(matmul_dtype), w2,
                     preferred_element_type=jnp.float32, precision=prec)
    logits = logits + params['fc2_b']
    return jax.nn.log_softmax(logits, axis=1)


# ----------------------------------------------------------------------------
# Params: torch-style layout + pre-generated "consistent" dropout masks.
# TODO(synk): the torch module creates masks lazily per unseen integer key and
# stores them in a stateful mask_dict; a pure functional kernel cannot mutate
# state, so masks for indices [0, num_masks) are pre-generated here instead.
# ----------------------------------------------------------------------------
def init_params(key, num_masks=NUM_MASKS):
    ks = jax.random.split(key, 5)
    p = {}
    p['fc1_w'] = 0.05 * jax.random.normal(ks[0], (D_H, D_IN), jnp.float32)
    p['fc1_b'] = 0.05 * jax.random.normal(ks[1], (D_H,), jnp.float32)
    p['fc2_w'] = 0.1 * jax.random.normal(ks[2], (D_OUT, D_H), jnp.float32)
    p['fc2_b'] = 0.1 * jax.random.normal(ks[3], (D_OUT,), jnp.float32)
    p['masks'] = jax.random.bernoulli(
        ks[4], 1.0 - P, (num_masks, D_H)).astype(jnp.float32)
    return p


if __name__ == "__main__":
    key = jax.random.PRNGKey(0)
    pkey, xkey = jax.random.split(key)
    params = init_params(pkey)
    x = jax.random.normal(xkey, (8, D_IN), jnp.float32)   # batch of 8 flat MNIST

    fwd = jax.jit(net_forward_pallas, static_argnames=("block_b",))

    # 1) Fast path (bf16 MXU operands, f32 accumulate) vs matched-precision ref.
    #    Tolerance is loose: bf16 quantization + mask-fold rounding-order diffs.
    prep_bf16 = prepare_params(params, jnp.bfloat16)
    out_fast = jax.block_until_ready(fwd(prep_bf16, x, 1))
    assert out_fast.shape == (8, D_OUT), out_fast.shape
    assert bool(jnp.all(jnp.isfinite(out_fast)))
    ref_bf16 = net_forward_reference(params, x, 1, matmul_dtype=jnp.bfloat16)
    err_fast = float(jnp.max(jnp.abs(out_fast - ref_bf16)))
    assert err_fast < 1e-1, f"bf16-path mismatch: max abs err = {err_fast}"
    # valid log-probabilities: per-row logsumexp == 0
    lse = jnp.log(jnp.sum(jnp.exp(out_fast), axis=1))
    assert float(jnp.max(jnp.abs(lse))) < 1e-3

    # 2) Exact-semantics path (f32 HIGHEST) vs exact PyTorch-equivalent ref;
    #    also exercises the mask-index clipping (5 -> num_masks-1).
    prep_f32 = prepare_params(params, jnp.float32)
    out_f32 = jax.block_until_ready(fwd(prep_f32, x, 5))
    ref_f32 = net_forward_reference(params, x, 5, matmul_dtype=jnp.float32)
    err_f32 = float(jnp.max(jnp.abs(out_f32 - ref_f32)))
    assert err_f32 < 2e-3, f"f32-path mismatch: max abs err = {err_f32}"

    # 3) Native bf16 activations (halves the dominant x DMA) still agree.
    out_bf16x = jax.block_until_ready(fwd(prep_bf16, x.astype(jnp.bfloat16), 1))
    err_x = float(jnp.max(jnp.abs(out_bf16x - out_fast)))
    assert err_x < 1.5e-1, f"bf16-x path mismatch: max abs err = {err_x}"

    print("KERNEL_OK")
</pallas_src>

<mosaic_0001>
module attributes {stable_mosaic.version = 11 : i64} {
  func.func @_net_kernel(%arg0: i32, %arg1: memref<8x784xf32, #tpu.memory_space<vmem>>, %arg2: memref<784x256xbf16, #tpu.memory_space<vmem>>, %arg3: memref<1x256xf32, #tpu.memory_space<vmem>>, %arg4: memref<256x10xbf16, #tpu.memory_space<vmem>>, %arg5: memref<1x10xf32, #tpu.memory_space<vmem>>, %arg6: memref<8x10xf32, #tpu.memory_space<vmem>>) attributes {dimension_semantics = [#tpu.dimension_semantics<parallel>], iteration_bounds = array<i64: 1>, scalar_prefetch = 0 : i64, scratch_operands = 0 : i64, tpu.core_type = #tpu.core_type<tc>, window_params = [{transform_indices = @transform_0, window_bounds = array<i64: 8, 784>}, {pipeline_mode = #tpu.pipeline_mode<synchronous>, transform_indices = @transform_1, window_bounds = array<i64: 784, 256>}, {pipeline_mode = #tpu.pipeline_mode<synchronous>, transform_indices = @transform_2, window_bounds = array<i64: 1, 256>}, {pipeline_mode = #tpu.pipeline_mode<synchronous>, transform_indices = @transform_3, window_bounds = array<i64: 256, 10>}, {pipeline_mode = #tpu.pipeline_mode<synchronous>, transform_indices = @transform_4, window_bounds = array<i64: 1, 10>}, {transform_indices = @transform_5, window_bounds = array<i64: 8, 10>}]} {
    %c0 = arith.constant 0 : index
    %c0_0 = arith.constant 0 : index
    %0 = vector.load %arg1[%c0, %c0_0] : memref<8x784xf32, #tpu.memory_space<vmem>>, vector<8x784xf32>
    %1 = arith.truncf %0 : vector<8x784xf32> to vector<8x784xbf16>
    %c0_1 = arith.constant 0 : index
    %c0_2 = arith.constant 0 : index
    %2 = vector.load %arg2[%c0_1, %c0_2] : memref<784x256xbf16, #tpu.memory_space<vmem>>, vector<784x256xbf16>
    %cst = arith.constant dense<0.000000e+00> : vector<8x256xf32>
    %3 = tpu.matmul %1, %2, %cst {dimension_numbers = #tpu.dot_dimension_numbers<[1], [0], [0], [1], [0, 0, 1, 1], [], []>} : vector<8x784xbf16>, vector<784x256xbf16>, vector<8x256xf32> -> vector<8x256xf32>
    %c0_3 = arith.constant 0 : index
    %c0_4 = arith.constant 0 : index
    %4 = vector.load %arg3[%c0_3, %c0_4] : memref<1x256xf32, #tpu.memory_space<vmem>>, vector<1x256xf32>
    %5 = vector.broadcast %4 : vector<1x256xf32> to vector<8x256xf32>
    %6 = arith.addf %3, %5 : vector<8x256xf32>
    %cst_5 = arith.constant 0.000000e+00 : f32
    %7 = vector.broadcast %cst_5 : f32 to vector<8x256xf32>
    %8 = arith.maximumf %6, %7 : vector<8x256xf32>
    %9 = arith.truncf %8 : vector<8x256xf32> to vector<8x256xbf16>
    %c0_6 = arith.constant 0 : index
    %c0_7 = arith.constant 0 : index
    %10 = vector.load %arg4[%c0_6, %c0_7] : memref<256x10xbf16, #tpu.memory_space<vmem>>, vector<256x10xbf16>
    %cst_8 = arith.constant dense<0.000000e+00> : vector<8x10xf32>
    %11 = tpu.matmul %9, %10, %cst_8 {dimension_numbers = #tpu.dot_dimension_numbers<[1], [0], [0], [1], [0, 0, 1, 1], [], []>} : vector<8x256xbf16>, vector<256x10xbf16>, vector<8x10xf32> -> vector<8x10xf32>
    %c0_9 = arith.constant 0 : index
    %c0_10 = arith.constant 0 : index
    %12 = vector.load %arg5[%c0_9, %c0_10] : memref<1x10xf32, #tpu.memory_space<vmem>>, vector<1x10xf32>
    %13 = vector.broadcast %12 : vector<1x10xf32> to vector<8x10xf32>
    %14 = arith.addf %11, %13 : vector<8x10xf32>
    %cst_11 = arith.constant dense<0xFF800000> : vector<8xf32>
    %15 = vector.multi_reduction <maximumf>, %14, %cst_11 [1] : vector<8x10xf32> to vector<8xf32>
    %16 = vector.shape_cast %15 : vector<8xf32> to vector<8x1xf32>
    %17 = vector.broadcast %16 : vector<8x1xf32> to vector<8x10xf32>
    %18 = arith.subf %14, %17 : vector<8x10xf32>
    %19 = math.exp %18 : vector<8x10xf32>
    %cst_12 = arith.constant dense<0.000000e+00> : vector<8xf32>
    %20 = vector.multi_reduction <add>, %19, %cst_12 [1] : vector<8x10xf32> to vector<8xf32>
    %21 = vector.shape_cast %20 : vector<8xf32> to vector<8x1xf32>
    %22 = math.log %21 : vector<8x1xf32>
    %23 = vector.broadcast %22 : vector<8x1xf32> to vector<8x10xf32>
    %24 = arith.subf %18, %23 : vector<8x10xf32>
    %c0_13 = arith.constant 0 : index
    %c0_14 = arith.constant 0 : index
    %25 = vector.load %arg6[%c0_13, %c0_14] : memref<8x10xf32, #tpu.memory_space<vmem>>, vector<8x10xf32>
    tpu.vector_store %arg6[%c0_13, %c0_14], %24 {strides = array<i32>} : memref<8x10xf32, #tpu.memory_space<vmem>>, vector<8x10xf32>,
    return
  }
  func.func @transform_0(%arg0: i32) -> (i32, i32) {
    %c0_i32 = arith.constant 0 : i32
    %c0_i32_0 = arith.constant 0 : i32
    return %arg0, %c0_i32 : i32, i32
  }
  func.func @transform_1(%arg0: i32) -> (i32, i32) {
    %c0_i32 = arith.constant 0 : i32
    %c0_i32_0 = arith.constant 0 : i32
    %c0_i32_1 = arith.constant 0 : i32
    return %c0_i32, %c0_i32_0 : i32, i32
  }
  func.func @transform_2(%arg0: i32) -> (i32, i32) {
    %c0_i32 = arith.constant 0 : i32
    %c0_i32_0 = arith.constant 0 : i32
    %c0_i32_1 = arith.constant 0 : i32
    return %c0_i32, %c0_i32_0 : i32, i32
  }
  func.func @transform_3(%arg0: i32) -> (i32, i32) {
    %c0_i32 = arith.constant 0 : i32
    %c0_i32_0 = arith.constant 0 : i32
    %c0_i32_1 = arith.constant 0 : i32
    return %c0_i32, %c0_i32_0 : i32, i32
  }
  func.func @transform_4(%arg0: i32) -> (i32, i32) {
    %c0_i32 = arith.constant 0 : i32
    %c0_i32_0 = arith.constant 0 : i32
    %c0_i32_1 = arith.constant 0 : i32
    return %c0_i32, %c0_i32_0 : i32, i32
  }
  func.func @transform_5(%arg0: i32) -> (i32, i32) {
    %c0_i32 = arith.constant 0 : i32
    %c0_i32_0 = arith.constant 0 : i32
    return %arg0, %c0_i32 : i32, i32
  }
}

</mosaic_0001>

<llo_original>
// kernel: net_forward_pallas.1
$region0: #{net_forward_pallas.1}
  #allocation0 [shape = 'u32[]', space=smem, size = 0x4, offset = 0x4, fixed_abs, tag = 'smem constant byte address 0x4 - core index']
  #allocation1 [shape = 'u32[144,128]{1,0:T(1,128)}', space=vmem, size = 0x12000, scoped, tag = 'internal scratch']
  %s0 = inlined_call_operand.vmem [shape: f32[8,784], index: 0, kind: input, shape index: {}]
  %s1 = inlined_call_operand.hbm [shape: bf16[784,256], index: 1, kind: input, shape index: {}]
  %s2 = inlined_call_operand.vmem [shape: f32[1,256], index: 2, kind: input, shape index: {}]
  %s3 = inlined_call_operand.vmem [shape: bf16[256,10], index: 3, kind: input, shape index: {}]
  %s4 = inlined_call_operand.vmem [shape: f32[1,10], index: 4, kind: input, shape index: {}]
  %s5 = inlined_call_operand.hbm [shape: f32[8,10], index: 5, kind: output, shape index: {}]
  %s6 = sld [smem:[#allocation0]]
  $region34: #{net_forward_pallas.1} parent=0
    _
  %s8 = ssub.s32 1, %s6
  %s9 = scalar_select 0, %s8, %s6
  $region1: #{net_forward_pallas.1} parent=0
    #allocation2 [shape = 'u8[401408]{0}', space=vmem, size = 0x62000, scoped, tag = 'input window, operand 1, single buffered']
    #allocation3 [shape = 's32[1]{0}', space=sflag, size = 0x4, scoped, tag = 'scoped memory for net_forward_pallas.1']
    #allocation4 [shape = 's32[1]{0}', space=sflag, size = 0x4, scoped, tag = 'scoped memory for net_forward_pallas.1']
    #allocation5 [shape = 'u8[4096]{0}', space=vmem, size = 0x1000, scoped, tag = 'output window, operand 0, single buffered']
    %10 = vsyncpa [#allocation3], 0
    %11 = vsyncpa [#allocation4], 0
    // Predicated region
    $region2: #{net_forward_pallas.1} parent=1 // pred_check
      _
    $region3: #{net_forward_pallas.1} parent=1 // pred_check_branch
      %13 = sbr.rel (0) target = $region5
    $region4: #{net_forward_pallas.1} parent=1 // pred_region
      _
    $region5: #{net_forward_pallas.1} parent=1 // pred_fallthru
      _
    // Predicated region
    $region6: #{net_forward_pallas.1} parent=1 // pred_check
      _
    $region7: #{net_forward_pallas.1} parent=1 // pred_check_branch
      %15 = sbr.rel (0) target = $region9
    $region8: #{net_forward_pallas.1} parent=1 // pred_region
      %s17 = ssub.s32 12544, 12544
      %18 = vsyncadd [#allocation3], %s17
      %s19 = sshll.u32 [#allocation2], 4
      %s20 = int_to_ptr.vmem [resolvable:$true] %s19
      %25 = dma.hbm_to_vmem [thread:$0]  %s1, 12544, %s20, [#allocation3], 128, 128, 8
    $region9: #{net_forward_pallas.1} parent=1 // pred_fallthru
      _
    // Predicated region
    $region10: #{net_forward_pallas.1} parent=1 // pred_check
      _
    $region11: #{net_forward_pallas.1} parent=1 // pred_check_branch
      %27 = sbr.rel (0) target = $region13
    $region12: #{net_forward_pallas.1} parent=1 // pred_region
      _
    $region13: #{net_forward_pallas.1} parent=1 // pred_fallthru
      _
    // Predicated region
    $region14: #{net_forward_pallas.1} parent=1 // pred_check
      _
    $region15: #{net_forward_pallas.1} parent=1 // pred_check_branch
      %29 = sbr.rel (0) target = $region17
    $region16: #{net_forward_pallas.1} parent=1 // pred_region
      _
    $region17: #{net_forward_pallas.1} parent=1 // pred_fallthru
      _
    // Predicated region
    $region18: #{net_forward_pallas.1} parent=1 // pred_check
      _
    $region19: #{net_forward_pallas.1} parent=1 // pred_check_branch
      %31 = sbr.rel (0) target = $region21
    $region20: #{net_forward_pallas.1} parent=1 // pred_region
      _
    $region21: #{net_forward_pallas.1} parent=1 // pred_fallthru
      _
    // Predicated region
    $region22: #{net_forward_pallas.1} parent=1 // pred_check
      _
    $region23: #{net_forward_pallas.1} parent=1 // pred_check_branch
      %33 = sbr.rel (0) target = $region25
    $region24: #{net_forward_pallas.1} parent=1 // pred_region
      %34 = dma.done [#allocation3], 12544
    $region25: #{net_forward_pallas.1} parent=1 // pred_fallthru
      _
    %v36 = vld [vmem:[%s0] sm:$0xff]
    %v37 = vld [vmem:[%s0 + $0x8] sm:$0xff]
    %v38 = vld [vmem:[%s0 + $0x10] sm:$0xff]
    %v39 = vld [vmem:[%s0 + $0x18] sm:$0xff]
    %v40 = vld [vmem:[%s0 + $0x20] sm:$0xff]
    %v41 = vld [vmem:[%s0 + $0x28] sm:$0xff]
    %v42 = vld [vmem:[%s0 + $0x30] sm:$0xff]
    %v43 = vpack.c.bf16 %v36, %v36
    %v44 = vpack.c.bf16 %v37, %v37
    %v45 = vpack.c.bf16 %v38, %v38
    %v46 = vpack.c.bf16 %v39, %v39
    %v47 = vpack.c.bf16 %v40, %v40
    %v48 = vpack.c.bf16 %v41, %v41
    %v49 = vpack.c.bf16 %v42, %v42
    %v50 = vld [vmem:[#allocation2] sm:$0xff]
    %v51 = vld [vmem:[#allocation2 + $0x8] sm:$0xff]
    %v52 = vld [vmem:[#allocation2 + $0x10] sm:$0xff]
    %v53 = vld [vmem:[#allocation2 + $0x18] sm:$0xff]
    %v54 = vld [vmem:[#allocation2 + $0x20] sm:$0xff]
    %v55 = vld [vmem:[#allocation2 + $0x28] sm:$0xff]
    %v56 = vld [vmem:[#allocation2 + $0x30] sm:$0xff]
    %v57 = vld [vmem:[#allocation2 + $0x38] sm:$0xff]
    %v58 = vld [vmem:[#allocation2 + $0x40] sm:$0xff]
    %v59 = vld [vmem:[#allocation2 + $0x48] sm:$0xff]
    %v60 = vld [vmem:[#allocation2 + $0x50] sm:$0xff]
    %v61 = vld [vmem:[#allocation2 + $0x58] sm:$0xff]
    %v62 = vld [vmem:[#allocation2 + $0x60] sm:$0xff]
    %v63 = vld [vmem:[#allocation2 + $0x68] sm:$0xff]
    %v64 = vld [vmem:[#allocation2 + $0x70] sm:$0xff]
    %v65 = vld [vmem:[#allocation2 + $0x78] sm:$0xff]
    %v66 = vld [vmem:[#allocation2 + $0x80] sm:$0xff]
    %v67 = vld [vmem:[#allocation2 + $0x88] sm:$0xff]
    %v68 = vld [vmem:[#allocation2 + $0x90] sm:$0xff]
    %v69 = vld [vmem:[#allocation2 + $0x98] sm:$0xff]
    %v70 = vld [vmem:[#allocation2 + $0xa0] sm:$0xff]
    %v71 = vld [vmem:[#allocation2 + $0xa8] sm:$0xff]
    %v72 = vld [vmem:[#allocation2 + $0xb0] sm:$0xff]
    %v73 = vld [vmem:[#allocation2 + $0xb8] sm:$0xff]
    %v74 = vld [vmem:[#allocation2 + $0xc0] sm:$0xff]
    %v75 = vld [vmem:[#allocation2 + $0xc8] sm:$0xff]
    %v76 = vld [vmem:[#allocation2 + $0xd0] sm:$0xff]
    %v77 = vld [vmem:[#allocation2 + $0xd8] sm:$0xff]
    %v78 = vld [vmem:[#allocation2 + $0xe0] sm:$0xff]
    %v79 = vld [vmem:[#allocation2 + $0xe8] sm:$0xff]
    %v80 = vld [vmem:[#allocation2 + $0xf0] sm:$0xff]
    %v81 = vld [vmem:[#allocation2 + $0xf8] sm:$0xff]
    %v82 = vld [vmem:[#allocation2 + $0x100] sm:$0xff]
    %v83 = vld [vmem:[#allocation2 + $0x108] sm:$0xff]
    %v84 = vld [vmem:[#allocation2 + $0x110] sm:$0xff]
    %v85 = vld [vmem:[#allocation2 + $0x118] sm:$0xff]
    %v86 = vld [vmem:[#allocation2 + $0x120] sm:$0xff]
    %v87 = vld [vmem:[#allocation2 + $0x128] sm:$0xff]
    %v88 = vld [vmem:[#allocation2 + $0x130] sm:$0xff]
    %v89 = vld [vmem:[#allocation2 + $0x138] sm:$0xff]
    %v90 = vld [vmem:[#allocation2 + $0x140] sm:$0xff]
    %v91 = vld [vmem:[#allocation2 + $0x148] sm:$0xff]
    %v92 = vld [vmem:[#allocation2 + $0x150] sm:$0xff]
    %v93 = vld [vmem:[#allocation2 + $0x158] sm:$0xff]
    %v94 = vld [vmem:[#allocation2 + $0x160] sm:$0xff]
    %v95 = vld [vmem:[#allocation2 + $0x168] sm:$0xff]
    %v96 = vld [vmem:[#allocation2 + $0x170] sm:$0xff]
    %v97 = vld [vmem:[#allocation2 + $0x178] sm:$0xff]
    %v98 = vld [vmem:[#allocation2 + $0x180] sm:$0xff]
    %v99 = vld [vmem:[#allocation2 + $0x188] sm:$0xff]
    %v100 = vld [vmem:[#allocation2 + $0x190] sm:$0xff]
    %v101 = vld [vmem:[#allocation2 + $0x198] sm:$0xff]
    %v102 = vld [vmem:[#allocation2 + $0x1a0] sm:$0xff]
    %v103 = vld [vmem:[#allocation2 + $0x1a8] sm:$0xff]
    %v104 = vld [vmem:[#allocation2 + $0x1b0] sm:$0xff]
    %v105 = vld [vmem:[#allocation2 + $0x1b8] sm:$0xff]
    %v106 = vld [vmem:[#allocation2 + $0x1c0] sm:$0xff]
    %v107 = vld [vmem:[#allocation2 + $0x1c8] sm:$0xff]
    %v108 = vld [vmem:[#allocation2 + $0x1d0] sm:$0xff]
    %v109 = vld [vmem:[#allocation2 + $0x1d8] sm:$0xff]
    %v110 = vld [vmem:[#allocation2 + $0x1e0] sm:$0xff]
    %v111 = vld [vmem:[#allocation2 + $0x1e8] sm:$0xff]
    %v112 = vld [vmem:[#allocation2 + $0x1f0] sm:$0xff]
    %v113 = vld [vmem:[#allocation2 + $0x1f8] sm:$0xff]
    %v114 = vld [vmem:[#allocation2 + $0x200] sm:$0xff]
    %v115 = vld [vmem:[#allocation2 + $0x208] sm:$0xff]
    %v116 = vld [vmem:[#allocation2 + $0x210] sm:$0xff]
    %v117 = vld [vmem:[#allocation2 + $0x218] sm:$0xff]
    %v118 = vld [vmem:[#allocation2 + $0x220] sm:$0xff]
    %v119 = vld [vmem:[#allocation2 + $0x228] sm:$0xff]
    %v120 = vld [vmem:[#allocation2 + $0x230] sm:$0xff]
    %v121 = vld [vmem:[#allocation2 + $0x238] sm:$0xff]
    %v122 = vld [vmem:[#allocation2 + $0x240] sm:$0xff]
    %v123 = vld [vmem:[#allocation2 + $0x248] sm:$0xff]
    %v124 = vld [vmem:[#allocation2 + $0x250] sm:$0xff]
    %v125 = vld [vmem:[#allocation2 + $0x258] sm:$0xff]
    %v126 = vld [vmem:[#allocation2 + $0x260] sm:$0xff]
    %v127 = vld [vmem:[#allocation2 + $0x268] sm:$0xff]
    %v128 = vld [vmem:[#allocation2 + $0x270] sm:$0xff]
    %v129 = vld [vmem:[#allocation2 + $0x278] sm:$0xff]
    %v130 = vld [vmem:[#allocation2 + $0x280] sm:$0xff]
    %v131 = vld [vmem:[#allocation2 + $0x288] sm:$0xff]
    %v132 = vld [vmem:[#allocation2 + $0x290] sm:$0xff]
    %v133 = vld [vmem:[#allocation2 + $0x298] sm:$0xff]
    %v134 = vld [vmem:[#allocation2 + $0x2a0] sm:$0xff]
    %v135 = vld [vmem:[#allocation2 + $0x2a8] sm:$0xff]
    %v136 = vld [vmem:[#allocation2 + $0x2b0] sm:$0xff]
    %v137 = vld [vmem:[#allocation2 + $0x2b8] sm:$0xff]
    %v138 = vld [vmem:[#allocation2 + $0x2c0] sm:$0xff]
    %v139 = vld [vmem:[#allocation2 + $0x2c8] sm:$0xff]
    %v140 = vld [vmem:[#allocation2 + $0x2d0] sm:$0xff]
    %v141 = vld [vmem:[#allocation2 + $0x2d8] sm:$0xff]
    %v142 = vld [vmem:[#allocation2 + $0x2e0] sm:$0xff]
    %v143 = vld [vmem:[#allocation2 + $0x2e8] sm:$0xff]
    %v144 = vld [vmem:[#allocation2 + $0x2f0] sm:$0xff]
    %v145 = vld [vmem:[#allocation2 + $0x2f8] sm:$0xff]
    %v146 = vld [vmem:[#allocation2 + $0x300] sm:$0xff]
    %v147 = vld [vmem:[#allocation2 + $0x308] sm:$0xff]
    %v148 = vld [vmem:[%s2] sm:$0x3]
    %v150 = vlaneseq
    %v151 = vshrl.u32 %v150, 7
    %v152 = vsub.s32 0, %v151
    %v153 = vrot.slane %v148, %v152
    %v154 = vlaneseq
    %v155 = vshrl.u32 %v154, 7
    %v156 = vsub.s32 1, %v155
    %v157 = vrot.slane %v148, %v156
    %v258 = vunpack.c.l.b16 %v50
    %v259 = vunpack.c.h.b16 %v50
    %v260 = vunpack.c.l.b16 %v51
    %v261 = vunpack.c.h.b16 %v51
    %v262 = vunpack.c.l.b16 %v52
    %v263 = vunpack.c.h.b16 %v52
    %v264 = vunpack.c.l.b16 %v53
    %v265 = vunpack.c.h.b16 %v53
    %v266 = vunpack.c.l.b16 %v54
    %v267 = vunpack.c.h.b16 %v54
    %v268 = vunpack.c.l.b16 %v55
    %v269 = vunpack.c.h.b16 %v55
    %v270 = vunpack.c.l.b16 %v56
    %v271 = vunpack.c.h.b16 %v56
    %v272 = vunpack.c.l.b16 %v57
    %v273 = vunpack.c.h.b16 %v57
    %v274 = vunpack.c.l.b16 %v58
    %v275 = vunpack.c.h.b16 %v58
    %v276 = vunpack.c.l.b16 %v59
    %v277 = vunpack.c.h.b16 %v59
    %v278 = vunpack.c.l.b16 %v60
    %v279 = vunpack.c.h.b16 %v60
    %v280 = vunpack.c.l.b16 %v61
    %v281 = vunpack.c.h.b16 %v61
    %v282 = vunpack.c.l.b16 %v62
    %v283 = vunpack.c.h.b16 %v62
    %v284 = vunpack.c.l.b16 %v63
    %v285 = vunpack.c.h.b16 %v63
    %v286 = vunpack.c.l.b16 %v64
    %v287 = vunpack.c.h.b16 %v64
    %v288 = vunpack.c.l.b16 %v65
    %v289 = vunpack.c.h.b16 %v65
    %v290 = vunpack.c.l.b16 %v66
    %v291 = vunpack.c.h.b16 %v66
    %v292 = vunpack.c.l.b16 %v67
    %v293 = vunpack.c.h.b16 %v67
    %v294 = vunpack.c.l.b16 %v68
    %v295 = vunpack.c.h.b16 %v68
    %v296 = vunpack.c.l.b16 %v69
    %v297 = vunpack.c.h.b16 %v69
    %v298 = vunpack.c.l.b16 %v70
    %v299 = vunpack.c.h.b16 %v70
    %v300 = vunpack.c.l.b16 %v71
    %v301 = vunpack.c.h.b16 %v71
    %v302 = vunpack.c.l.b16 %v72
    %v303 = vunpack.c.h.b16 %v72
    %v304 = vunpack.c.l.b16 %v73
    %v305 = vunpack.c.h.b16 %v73
    %v306 = vunpack.c.l.b16 %v74
    %v307 = vunpack.c.h.b16 %v74
    %v308 = vunpack.c.l.b16 %v75
    %v309 = vunpack.c.h.b16 %v75
    %v310 = vunpack.c.l.b16 %v76
    %v311 = vunpack.c.h.b16 %v76
    %v312 = vunpack.c.l.b16 %v77
    %v313 = vunpack.c.h.b16 %v77
    %v314 = vunpack.c.l.b16 %v78
    %v315 = vunpack.c.h.b16 %v78
    %v316 = vunpack.c.l.b16 %v79
    %v317 = vunpack.c.h.b16 %v79
    %v318 = vunpack.c.l.b16 %v80
    %v319 = vunpack.c.h.b16 %v80
    %v320 = vunpack.c.l.b16 %v81
    %v321 = vunpack.c.h.b16 %v81
    %v322 = vunpack.c.l.b16 %v82
    %v323 = vunpack.c.h.b16 %v82
    %v324 = vunpack.c.l.b16 %v83
    %v325 = vunpack.c.h.b16 %v83
    %v326 = vunpack.c.l.b16 %v84
    %v327 = vunpack.c.h.b16 %v84
    %v328 = vunpack.c.l.b16 %v85
    %v329 = vunpack.c.h.b16 %v85
    %v330 = vunpack.c.l.b16 %v86
    %v331 = vunpack.c.h.b16 %v86
    %v332 = vunpack.c.l.b16 %v87
    %v333 = vunpack.c.h.b16 %v87
    %v334 = vunpack.c.l.b16 %v88
    %v335 = vunpack.c.h.b16 %v88
    %v336 = vunpack.c.l.b16 %v89
    %v337 = vunpack.c.h.b16 %v89
    %v338 = vunpack.c.l.b16 %v90
    %v339 = vunpack.c.h.b16 %v90
    %v340 = vunpack.c.l.b16 %v91
    %v341 = vunpack.c.h.b16 %v91
    %v342 = vunpack.c.l.b16 %v92
    %v343 = vunpack.c.h.b16 %v92
    %v344 = vunpack.c.l.b16 %v93
    %v345 = vunpack.c.h.b16 %v93
    %v346 = vunpack.c.l.b16 %v94
    %v347 = vunpack.c.h.b16 %v94
    %v348 = vunpack.c.l.b16 %v95
    %v349 = vunpack.c.h.b16 %v95
    %v350 = vunpack.c.l.b16 %v96
    %v351 = vunpack.c.h.b16 %v96
    %v352 = vunpack.c.l.b16 %v97
    %v353 = vunpack.c.h.b16 %v97
    %v354 = vunpack.c.l.b16 %v98
    %v355 = vunpack.c.h.b16 %v98
    %v356 = vunpack.c.l.b16 %v99
    %v357 = vunpack.c.h.b16 %v99
    %v358 = vunpack.c.l.b16 %v100
    %v359 = vunpack.c.h.b16 %v100
    %v360 = vunpack.c.l.b16 %v101
    %v361 = vunpack.c.h.b16 %v101
    %v362 = vunpack.c.l.b16 %v102
    %v363 = vunpack.c.h.b16 %v102
    %v364 = vunpack.c.l.b16 %v103
    %v365 = vunpack.c.h.b16 %v103
    %v366 = vunpack.c.l.b16 %v104
    %v367 = vunpack.c.h.b16 %v104
    %v368 = vunpack.c.l.b16 %v105
    %v369 = vunpack.c.h.b16 %v105
    %v370 = vunpack.c.l.b16 %v106
    %v371 = vunpack.c.h.b16 %v106
    %v372 = vunpack.c.l.b16 %v107
    %v373 = vunpack.c.h.b16 %v107
    %v374 = vunpack.c.l.b16 %v108
    %v375 = vunpack.c.h.b16 %v108
    %v376 = vunpack.c.l.b16 %v109
    %v377 = vunpack.c.h.b16 %v109
    %v378 = vunpack.c.l.b16 %v110
    %v379 = vunpack.c.h.b16 %v110
    %v380 = vunpack.c.l.b16 %v111
    %v381 = vunpack.c.h.b16 %v111
    %v382 = vunpack.c.l.b16 %v112
    %v383 = vunpack.c.h.b16 %v112
    %v384 = vunpack.c.l.b16 %v113
    %v385 = vunpack.c.h.b16 %v113
    %v386 = vunpack.c.l.b16 %v114
    %v387 = vunpack.c.h.b16 %v114
    %v388 = vunpack.c.l.b16 %v115
    %v389 = vunpack.c.h.b16 %v115
    %v390 = vunpack.c.l.b16 %v116
    %v391 = vunpack.c.h.b16 %v116
    %v392 = vunpack.c.l.b16 %v117
    %v393 = vunpack.c.h.b16 %v117
    %v394 = vunpack.c.l.b16 %v118
    %v395 = vunpack.c.h.b16 %v118
    %v396 = vunpack.c.l.b16 %v119
    %v397 = vunpack.c.h.b16 %v119
    %v398 = vunpack.c.l.b16 %v120
    %v399 = vunpack.c.h.b16 %v120
    %v400 = vunpack.c.l.b16 %v121
    %v401 = vunpack.c.h.b16 %v121
    %v402 = vunpack.c.l.b16 %v122
    %v403 = vunpack.c.h.b16 %v122
    %v404 = vunpack.c.l.b16 %v123
    %v405 = vunpack.c.h.b16 %v123
    %v406 = vunpack.c.l.b16 %v124
    %v407 = vunpack.c.h.b16 %v124
    %v408 = vunpack.c.l.b16 %v125
    %v409 = vunpack.c.h.b16 %v125
    %v410 = vunpack.c.l.b16 %v126
    %v411 = vunpack.c.h.b16 %v126
    %v412 = vunpack.c.l.b16 %v127
    %v413 = vunpack.c.h.b16 %v127
    %v414 = vunpack.c.l.b16 %v128
    %v415 = vunpack.c.h.b16 %v128
    %v416 = vunpack.c.l.b16 %v129
    %v417 = vunpack.c.h.b16 %v129
    %v418 = vunpack.c.l.b16 %v130
    %v419 = vunpack.c.h.b16 %v130
    %v420 = vunpack.c.l.b16 %v131
    %v421 = vunpack.c.h.b16 %v131
    %v422 = vunpack.c.l.b16 %v132
    %v423 = vunpack.c.h.b16 %v132
    %v424 = vunpack.c.l.b16 %v133
    %v425 = vunpack.c.h.b16 %v133
    %v426 = vunpack.c.l.b16 %v134
    %v427 = vunpack.c.h.b16 %v134
    %v428 = vunpack.c.l.b16 %v135
    %v429 = vunpack.c.h.b16 %v135
    %v430 = vunpack.c.l.b16 %v136
    %v431 = vunpack.c.h.b16 %v136
    %v432 = vunpack.c.l.b16 %v137
    %v433 = vunpack.c.h.b16 %v137
    %v434 = vunpack.c.l.b16 %v138
    %v435 = vunpack.c.h.b16 %v138
    %v436 = vunpack.c.l.b16 %v139
    %v437 = vunpack.c.h.b16 %v139
    %v438 = vunpack.c.l.b16 %v140
    %v439 = vunpack.c.h.b16 %v140
    %v440 = vunpack.c.l.b16 %v141
    %v441 = vunpack.c.h.b16 %v141
    %v442 = vunpack.c.l.b16 %v142
    %v443 = vunpack.c.h.b16 %v142
    %v444 = vunpack.c.l.b16 %v143
    %v445 = vunpack.c.h.b16 %v143
    %v446 = vunpack.c.l.b16 %v144
    %v447 = vunpack.c.h.b16 %v144
    %v448 = vunpack.c.l.b16 %v145
    %v449 = vunpack.c.h.b16 %v145
    %v450 = vunpack.c.l.b16 %v146
    %v451 = vunpack.c.h.b16 %v146
    %v452 = vunpack.c.l.b16 %v147
    %v453 = vunpack.c.h.b16 %v147
    %v454 = vpack.c.b16 %v260, %v258
    %v455 = vpack.c.b16 %v261, %v259
    %v456 = vpack.c.b16 %v264, %v262
    %v457 = vpack.c.b16 %v265, %v263
    %v458 = vpack.c.b16 %v268, %v266
    %v459 = vpack.c.b16 %v269, %v267
    %v460 = vpack.c.b16 %v272, %v270
    %v461 = vpack.c.b16 %v273, %v271
    %v462 = vpack.c.b16 %v276, %v274
    %v463 = vpack.c.b16 %v277, %v275
    %v464 = vpack.c.b16 %v280, %v278
    %v465 = vpack.c.b16 %v281, %v279
    %v466 = vpack.c.b16 %v284, %v282
    %v467 = vpack.c.b16 %v285, %v283
    %v468 = vpack.c.b16 %v288, %v286
    %v469 = vpack.c.b16 %v289, %v287
    %v470 = vpack.c.b16 %v292, %v290
    %v471 = vpack.c.b16 %v293, %v291
    %v472 = vpack.c.b16 %v296, %v294
    %v473 = vpack.c.b16 %v297, %v295
    %v474 = vpack.c.b16 %v300, %v298
    %v475 = vpack.c.b16 %v301, %v299
    %v476 = vpack.c.b16 %v304, %v302
    %v477 = vpack.c.b16 %v305, %v303
    %v478 = vpack.c.b16 %v308, %v306
    %v479 = vpack.c.b16 %v309, %v307
    %v480 = vpack.c.b16 %v312, %v310
    %v481 = vpack.c.b16 %v313, %v311
    %v482 = vpack.c.b16 %v316, %v314
    %v483 = vpack.c.b16 %v317, %v315
    %v484 = vpack.c.b16 %v320, %v318
    %v485 = vpack.c.b16 %v321, %v319
    %v486 = vpack.c.b16 %v324, %v322
    %v487 = vpack.c.b16 %v325, %v323
    %v488 = vpack.c.b16 %v328, %v326
    %v489 = vpack.c.b16 %v329, %v327
    %v490 = vpack.c.b16 %v332, %v330
    %v491 = vpack.c.b16 %v333, %v331
    %v492 = vpack.c.b16 %v336, %v334
    %v493 = vpack.c.b16 %v337, %v335
    %v494 = vpack.c.b16 %v340, %v338
    %v495 = vpack.c.b16 %v341, %v339
    %v496 = vpack.c.b16 %v344, %v342
    %v497 = vpack.c.b16 %v345, %v343
    %v498 = vpack.c.b16 %v348, %v346
    %v499 = vpack.c.b16 %v349, %v347
    %v500 = vpack.c.b16 %v352, %v350
    %v501 = vpack.c.b16 %v353, %v351
    %v502 = vpack.c.b16 %v356, %v354
    %v503 = vpack.c.b16 %v357, %v355
    %v504 = vpack.c.b16 %v360, %v358
    %v505 = vpack.c.b16 %v361, %v359
    %v506 = vpack.c.b16 %v364, %v362
    %v507 = vpack.c.b16 %v365, %v363
    %v508 = vpack.c.b16 %v368, %v366
    %v509 = vpack.c.b16 %v369, %v367
    %v510 = vpack.c.b16 %v372, %v370
    %v511 = vpack.c.b16 %v373, %v371
    %v512 = vpack.c.b16 %v376, %v374
    %v513 = vpack.c.b16 %v377, %v375
    %v514 = vpack.c.b16 %v380, %v378
    %v515 = vpack.c.b16 %v381, %v379
    %v516 = vpack.c.b16 %v384, %v382
    %v517 = vpack.c.b16 %v385, %v383
    %v518 = vpack.c.b16 %v388, %v386
    %v519 = vpack.c.b16 %v389, %v387
    %v520 = vpack.c.b16 %v392, %v390
    %v521 = vpack.c.b16 %v393, %v391
    %v522 = vpack.c.b16 %v396, %v394
    %v523 = vpack.c.b16 %v397, %v395
    %v524 = vpack.c.b16 %v400, %v398
    %v525 = vpack.c.b16 %v401, %v399
    %v526 = vpack.c.b16 %v404, %v402
    %v527 = vpack.c.b16 %v405, %v403
    %v528 = vpack.c.b16 %v408, %v406
    %v529 = vpack.c.b16 %v409, %v407
    %v530 = vpack.c.b16 %v412, %v410
    %v531 = vpack.c.b16 %v413, %v411
    %v532 = vpack.c.b16 %v416, %v414
    %v533 = vpack.c.b16 %v417, %v415
    %v534 = vpack.c.b16 %v420, %v418
    %v535 = vpack.c.b16 %v421, %v419
    %v536 = vpack.c.b16 %v424, %v422
    %v537 = vpack.c.b16 %v425, %v423
    %v538 = vpack.c.b16 %v428, %v426
    %v539 = vpack.c.b16 %v429, %v427
    %v540 = vpack.c.b16 %v432, %v430
    %v541 = vpack.c.b16 %v433, %v431
    %v542 = vpack.c.b16 %v436, %v434
    %v543 = vpack.c.b16 %v437, %v435
    %v544 = vpack.c.b16 %v440, %v438
    %v545 = vpack.c.b16 %v441, %v439
    %v546 = vpack.c.b16 %v444, %v442
    %v547 = vpack.c.b16 %v445, %v443
    %v548 = vpack.c.b16 %v448, %v446
    %v549 = vpack.c.b16 %v449, %v447
    %v550 = vpack.c.b16 %v452, %v450
    %v551 = vpack.c.b16 %v453, %v451
    %vm650 = vcmask 130048
    %v652 = vsel %vm650, %v49, 0
    %654 = vmatprep.subr.bf16.mxu0 %v469
    %655 = vmatpush1.bf16.msra.mxu0 %v468
    %656 = vmatprep.subr.bf16.mxu0 %v467
    %657 = vmatpush1.bf16.msra.mxu0 %v466
    %658 = vmatprep.subr.bf16.mxu0 %v465
    %659 = vmatpush1.bf16.msra.mxu0 %v464
    %660 = vmatprep.subr.bf16.mxu0 %v463
    %661 = vmatpush1.bf16.msra.mxu0 %v462
    %662 = vmatprep.subr.bf16.mxu0 %v461
    %663 = vmatpush1.bf16.msra.mxu0 %v460
    %664 = vmatprep.subr.bf16.mxu0 %v459
    %665 = vmatpush1.bf16.msra.mxu0 %v458
    %666 = vmatprep.subr.bf16.mxu0 %v457
    %667 = vmatpush1.bf16.msra.mxu0 %v456
    %668 = vmatprep.subr.bf16.mxu0 %v455
    %669 = vmatpush1.bf16.msra.mxu0 %v454
    %670 = vmatprep.subr.bf16.mxu0 %v485
    %671 = vmatpush2.bf16.msra.mxu0 %v484
    %672 = vmatprep.subr.bf16.mxu0 %v483
    %673 = vmatpush2.bf16.msra.mxu0 %v482
    %674 = vmatprep.subr.bf16.mxu0 %v481
    %675 = vmatpush2.bf16.msra.mxu0 %v480
    %676 = vmatprep.subr.bf16.mxu0 %v479
    %677 = vmatpush2.bf16.msra.mxu0 %v478
    %678 = vmatprep.subr.bf16.mxu0 %v477
    %679 = vmatpush2.bf16.msra.mxu0 %v476
    %680 = vmatprep.subr.bf16.mxu0 %v475
    %681 = vmatpush2.bf16.msra.mxu0 %v474
    %682 = vmatprep.subr.bf16.mxu0 %v473
    %683 = vmatpush2.bf16.msra.mxu0 %v472
    %684 = vmatprep.subr.bf16.mxu0 %v471
    %685 = vmatpush2.bf16.msra.mxu0 %v470
    %686 = vmatprep.mubr.bf16.mxu0 %v44
    %687 = vmatmul.mubr.bf16.gmra.mxu0 %v43
    %v688 = vpop.f32.mrf.mxu0
    %v689 = vadd.f32 %v153, %v688
    %v690 = vpop.f32.mrf.mxu0
    %v691 = vadd.f32 %v157, %v690
    %v692 = vpop.f32.mrf.mxu0
    %v693 = vpop.f32.mrf.mxu0
    %694 = vdwg.mxu0
    %695 = vmatprep.subr.bf16.mxu0 %v501
    %696 = vmatpush1.bf16.msra.mxu0 %v500
    %697 = vmatprep.subr.bf16.mxu0 %v499
    %698 = vmatpush1.bf16.msra.mxu0 %v498
    %699 = vmatprep.subr.bf16.mxu0 %v497
    %700 = vmatpush1.bf16.msra.mxu0 %v496
    %701 = vmatprep.subr.bf16.mxu0 %v495
    %702 = vmatpush1.bf16.msra.mxu0 %v494
    %703 = vmatprep.subr.bf16.mxu0 %v493
    %704 = vmatpush1.bf16.msra.mxu0 %v492
    %705 = vmatprep.subr.bf16.mxu0 %v491
    %706 = vmatpush1.bf16.msra.mxu0 %v490
    %707 = vmatprep.subr.bf16.mxu0 %v489
    %708 = vmatpush1.bf16.msra.mxu0 %v488
    %709 = vmatprep.subr.bf16.mxu0 %v487
    %710 = vmatpush1.bf16.msra.mxu0 %v486
    %711 = vmatprep.subr.bf16.mxu0 %v517
    %712 = vmatpush2.bf16.msra.mxu0 %v516
    %713 = vmatprep.subr.bf16.mxu0 %v515
    %714 = vmatpush2.bf16.msra.mxu0 %v514
    %715 = vmatprep.subr.bf16.mxu0 %v513
    %716 = vmatpush2.bf16.msra.mxu0 %v512
    %717 = vmatprep.subr.bf16.mxu0 %v511
    %718 = vmatpush2.bf16.msra.mxu0 %v510
    %719 = vmatprep.subr.bf16.mxu0 %v509
    %720 = vmatpush2.bf16.msra.mxu0 %v508
    %721 = vmatprep.subr.bf16.mxu0 %v507
    %722 = vmatpush2.bf16.msra.mxu0 %v506
    %723 = vmatprep.subr.bf16.mxu0 %v505
    %724 = vmatpush2.bf16.msra.mxu0 %v504
    %725 = vmatprep.subr.bf16.mxu0 %v503
    %726 = vmatpush2.bf16.msra.mxu0 %v502
    %727 = vmatprep.mubr.bf16.mxu0 %v46
    %728 = vmatmul.mubr.bf16.gmra.mxu0 %v45
    %v729 = vpop.f32.mrf.mxu0
    %v730 = vadd.f32 %v689, %v729
    %v731 = vpop.f32.mrf.mxu0
    %v732 = vadd.f32 %v691, %v731
    %v733 = vpop.f32.mrf.mxu0
    %v734 = vpop.f32.mrf.mxu0
    %735 = vdwg.mxu0
    %736 = vmatprep.subr.bf16.mxu0 %v533
    %737 = vmatpush1.bf16.msra.mxu0 %v532
    %738 = vmatprep.subr.bf16.mxu0 %v531
    %739 = vmatpush1.bf16.msra.mxu0 %v530
    %740 = vmatprep.subr.bf16.mxu0 %v529
    %741 = vmatpush1.bf16.msra.mxu0 %v528
    %742 = vmatprep.subr.bf16.mxu0 %v527
    %743 = vmatpush1.bf16.msra.mxu0 %v526
    %744 = vmatprep.subr.bf16.mxu0 %v525
    %745 = vmatpush1.bf16.msra.mxu0 %v524
    %746 = vmatprep.subr.bf16.mxu0 %v523
    %747 = vmatpush1.bf16.msra.mxu0 %v522
    %748 = vmatprep.subr.bf16.mxu0 %v521
    %749 = vmatpush1.bf16.msra.mxu0 %v520
    %750 = vmatprep.subr.bf16.mxu0 %v519
    %751 = vmatpush1.bf16.msra.mxu0 %v518
    %752 = vmatprep.subr.bf16.mxu0 %v549
    %753 = vmatpush2.bf16.msra.mxu0 %v548
    %754 = vmatprep.subr.bf16.mxu0 %v547
    %755 = vmatpush2.bf16.msra.mxu0 %v546
    %756 = vmatprep.subr.bf16.mxu0 %v545
    %757 = vmatpush2.bf16.msra.mxu0 %v544
    %758 = vmatprep.subr.bf16.mxu0 %v543
    %759 = vmatpush2.bf16.msra.mxu0 %v542
    %760 = vmatprep.subr.bf16.mxu0 %v541
    %761 = vmatpush2.bf16.msra.mxu0 %v540
    %762 = vmatprep.subr.bf16.mxu0 %v539
    %763 = vmatpush2.bf16.msra.mxu0 %v538
    %764 = vmatprep.subr.bf16.mxu0 %v537
    %765 = vmatpush2.bf16.msra.mxu0 %v536
    %766 = vmatprep.subr.bf16.mxu0 %v535
    %767 = vmatpush2.bf16.msra.mxu0 %v534
    %768 = vmatprep.mubr.bf16.mxu0 %v48
    %769 = vmatmul.mubr.bf16.gmra.mxu0 %v47
    %v770 = vpop.f32.mrf.mxu0
    %v771 = vadd.f32 %v730, %v770
    %v772 = vpop.f32.mrf.mxu0
    %v773 = vadd.f32 %v732, %v772
    %v774 = vpop.f32.mrf.mxu0
    %v775 = vpop.f32.mrf.mxu0
    %776 = vdwg.mxu0
    %777 = vmatprep.subr.bf16.mxu0 0
    %778 = vmatpush1.bf16.msra.mxu0 0
    %779 = vmatprep.subr.bf16.mxu0 0
    %780 = vmatpush1.bf16.msra.mxu0 0
    %781 = vmatprep.subr.bf16.mxu0 0
    %782 = vmatpush1.bf16.msra.mxu0 0
    %783 = vmatprep.subr.bf16.mxu0 0
    %784 = vmatpush1.bf16.msra.mxu0 0
    %785 = vmatprep.subr.bf16.mxu0 0
    %786 = vmatpush1.bf16.msra.mxu0 0
    %787 = vmatprep.subr.bf16.mxu0 0
    %788 = vmatpush1.bf16.msra.mxu0 0
    %789 = vmatprep.subr.bf16.mxu0 0
    %790 = vmatpush1.bf16.msra.mxu0 0
    %791 = vmatprep.subr.bf16.mxu0 %v551
    %792 = vmatpush1.bf16.msra.mxu0 %v550
    %793 = vmatprep.subr.bf16.mxu0 0
    %794 = vmatpush2.bf16.msra.mxu0 0
    %795 = vmatprep.subr.bf16.mxu0 0
    %796 = vmatpush2.bf16.msra.mxu0 0
    %797 = vmatprep.subr.bf16.mxu0 0
    %798 = vmatpush2.bf16.msra.mxu0 0
    %799 = vmatprep.subr.bf16.mxu0 0
    %800 = vmatpush2.bf16.msra.mxu0 0
    %801 = vmatprep.subr.bf16.mxu0 0
    %802 = vmatpush2.bf16.msra.mxu0 0
    %803 = vmatprep.subr.bf16.mxu0 0
    %804 = vmatpush2.bf16.msra.mxu0 0
    %805 = vmatprep.subr.bf16.mxu0 0
    %806 = vmatpush2.bf16.msra.mxu0 0
    %807 = vmatprep.subr.bf16.mxu0 0
    %808 = vmatpush2.bf16.msra.mxu0 0
    %809 = vmatprep.mubr.bf16.mxu0 0
    %810 = vmatmul.mubr.bf16.gmra.mxu0 %v652
    %v811 = vpop.f32.mrf.mxu0
    %v812 = vadd.f32 %v771, %v811
    %v813 = vpop.f32.mrf.mxu0
    %v814 = vadd.f32 %v773, %v813
    %v815 = vpop.f32.mrf.mxu0
    %v816 = vpop.f32.mrf.mxu0
    %817 = vdwg.mxu0
    %v818 = vmax.f32 %v812, 0.0
    %v819 = vmax.f32 %v814, 0.0
    %v820 = vpack.c.bf16 %v818, %v818
    %v821 = vpack.c.bf16 %v819, %v819
    %v822 = vld [vmem:[%s3] sm:$0xf]
    %v823 = vld [vmem:[%s3 + $0x4] sm:$0xf]
    %v824 = vld [vmem:[%s3 + $0x8] sm:$0xf]
    %v825 = vld [vmem:[%s3 + $0xc] sm:$0xf]
    %v826 = vld [vmem:[%s3 + $0x10] sm:$0xf]
    %v827 = vld [vmem:[%s3 + $0x14] sm:$0xf]
    %v828 = vld [vmem:[%s3 + $0x18] sm:$0xf]
    %v829 = vld [vmem:[%s3 + $0x1c] sm:$0xf]
    %v830 = vld [vmem:[%s3 + $0x20] sm:$0xf]
    %v831 = vld [vmem:[%s3 + $0x24] sm:$0xf]
    %v832 = vld [vmem:[%s3 + $0x28] sm:$0xf]
    %v833 = vld [vmem:[%s3 + $0x2c] sm:$0xf]
    %v834 = vld [vmem:[%s3 + $0x30] sm:$0xf]
    %v835 = vld [vmem:[%s3 + $0x34] sm:$0xf]
    %v836 = vld [vmem:[%s3 + $0x38] sm:$0xf]
    %v837 = vld [vmem:[%s3 + $0x3c] sm:$0xf]
    %v838 = vld [vmem:[%s3 + $0x40] sm:$0xf]
    %v839 = vld [vmem:[%s3 + $0x44] sm:$0xf]
    %v840 = vld [vmem:[%s3 + $0x48] sm:$0xf]
    %v841 = vld [vmem:[%s3 + $0x4c] sm:$0xf]
    %v842 = vld [vmem:[%s3 + $0x50] sm:$0xf]
    %v843 = vld [vmem:[%s3 + $0x54] sm:$0xf]
    %v844 = vld [vmem:[%s3 + $0x58] sm:$0xf]
    %v845 = vld [vmem:[%s3 + $0x5c] sm:$0xf]
    %v846 = vld [vmem:[%s3 + $0x60] sm:$0xf]
    %v847 = vld [vmem:[%s3 + $0x64] sm:$0xf]
    %v848 = vld [vmem:[%s3 + $0x68] sm:$0xf]
    %v849 = vld [vmem:[%s3 + $0x6c] sm:$0xf]
    %v850 = vld [vmem:[%s3 + $0x70] sm:$0xf]
    %v851 = vld [vmem:[%s3 + $0x74] sm:$0xf]
    %v852 = vld [vmem:[%s3 + $0x78] sm:$0xf]
    %v853 = vld [vmem:[%s3 + $0x7c] sm:$0xf]
    %v854 = vld [vmem:[%s4] sm:$0x1]
    %v856 = vlaneseq
    %v857 = vshrl.u32 %v856, 7
    %v858 = vsub.s32 0, %v857
    %v859 = vrot.slane %v854, %v858
    %v893 = vunpack.c.l.b16 %v822
    %v894 = vunpack.c.l.b16 %v823
    %v895 = vunpack.c.l.b16 %v824
    %v896 = vunpack.c.l.b16 %v825
    %v897 = vunpack.c.l.b16 %v826
    %v898 = vunpack.c.l.b16 %v827
    %v899 = vunpack.c.l.b16 %v828
    %v900 = vunpack.c.l.b16 %v829
    %v901 = vunpack.c.l.b16 %v830
    %v902 = vunpack.c.l.b16 %v831
    %v903 = vunpack.c.l.b16 %v832
    %v904 = vunpack.c.l.b16 %v833
    %v905 = vunpack.c.l.b16 %v834
    %v906 = vunpack.c.l.b16 %v835
    %v907 = vunpack.c.l.b16 %v836
    %v908 = vunpack.c.l.b16 %v837
    %v909 = vunpack.c.l.b16 %v838
    %v910 = vunpack.c.l.b16 %v839
    %v911 = vunpack.c.l.b16 %v840
    %v912 = vunpack.c.l.b16 %v841
    %v913 = vunpack.c.l.b16 %v842
    %v914 = vunpack.c.l.b16 %v843
    %v915 = vunpack.c.l.b16 %v844
    %v916 = vunpack.c.l.b16 %v845
    %v917 = vunpack.c.l.b16 %v846
    %v918 = vunpack.c.l.b16 %v847
    %v919 = vunpack.c.l.b16 %v848
    %v920 = vunpack.c.l.b16 %v849
    %v921 = vunpack.c.l.b16 %v850
    %v922 = vunpack.c.l.b16 %v851
    %v923 = vunpack.c.l.b16 %v852
    %v924 = vunpack.c.l.b16 %v853
    %v925 = vpack.c.b16 %v894, %v893
    %v926 = vpack.c.b16 %v896, %v895
    %v927 = vpack.c.b16 %v898, %v897
    %v928 = vpack.c.b16 %v900, %v899
    %v929 = vpack.c.b16 %v902, %v901
    %v930 = vpack.c.b16 %v904, %v903
    %v931 = vpack.c.b16 %v906, %v905
    %v932 = vpack.c.b16 %v908, %v907
    %v933 = vpack.c.b16 %v910, %v909
    %v934 = vpack.c.b16 %v912, %v911
    %v935 = vpack.c.b16 %v914, %v913
    %v936 = vpack.c.b16 %v916, %v915
    %v937 = vpack.c.b16 %v918, %v917
    %v938 = vpack.c.b16 %v920, %v919
    %v939 = vpack.c.b16 %v922, %v921
    %v940 = vpack.c.b16 %v924, %v923
    %957 = vmatprep.subr.bf16.mxu0 0
    %958 = vmatpush1.bf16.msra.mxu0 %v932
    %959 = vmatprep.subr.bf16.mxu0 0
    %960 = vmatpush1.bf16.msra.mxu0 %v931
    %961 = vmatprep.subr.bf16.mxu0 0
    %962 = vmatpush1.bf16.msra.mxu0 %v930
    %963 = vmatprep.subr.bf16.mxu0 0
    %964 = vmatpush1.bf16.msra.mxu0 %v929
    %965 = vmatprep.subr.bf16.mxu0 0
    %966 = vmatpush1.bf16.msra.mxu0 %v928
    %967 = vmatprep.subr.bf16.mxu0 0
    %968 = vmatpush1.bf16.msra.mxu0 %v927
    %969 = vmatprep.subr.bf16.mxu0 0
    %970 = vmatpush1.bf16.msra.mxu0 %v926
    %971 = vmatprep.subr.bf16.mxu0 0
    %972 = vmatpush1.bf16.msra.mxu0 %v925
    %973 = vmatprep.subr.bf16.mxu0 0
    %974 = vmatpush2.bf16.msra.mxu0 %v940
    %975 = vmatprep.subr.bf16.mxu0 0
    %976 = vmatpush2.bf16.msra.mxu0 %v939
    %977 = vmatprep.subr.bf16.mxu0 0
    %978 = vmatpush2.bf16.msra.mxu0 %v938
    %979 = vmatprep.subr.bf16.mxu0 0
    %980 = vmatpush2.bf16.msra.mxu0 %v937
    %981 = vmatprep.subr.bf16.mxu0 0
    %982 = vmatpush2.bf16.msra.mxu0 %v936
    %983 = vmatprep.subr.bf16.mxu0 0
    %984 = vmatpush2.bf16.msra.mxu0 %v935
    %985 = vmatprep.subr.bf16.mxu0 0
    %986 = vmatpush2.bf16.msra.mxu0 %v934
    %987 = vmatprep.subr.bf16.mxu0 0
    %988 = vmatpush2.bf16.msra.mxu0 %v933
    %989 = vmatprep.mubr.bf16.mxu0 %v821
    %990 = vmatmul.mubr.bf16.gmra.mxu0 %v820
    %v991 = vpop.f32.mrf.mxu0
    %v992 = vadd.f32 %v859, %v991
    %v993 = vpop.f32.mrf.mxu0
    %v994 = vpop.f32.mrf.mxu0
    %v995 = vpop.f32.mrf.mxu0
    %996 = vdwg.mxu0
    %vm997 = vcmask 80896
    %v998 = vsel %vm997, %v992, -inf
    %999 = vmax.xlane.f32.xlu0 %v998
    %v1000 = vpop.xlane.xlu0 %999
    %v1001 = vsub.f32 %v992, %v1000
    %v1002 = vmul.f32 %v1001, 1.442695
    %v1003 = vpow.pop %v1002
    %v1004 = vsel %vm997, %v1003, 0.0
    %1005 = vadd.xlane.f32.xlu0 %v1004
    %v1006 = vpop.xlane.xlu0 %1005
    %v1007 = vlog2.pop %v1006
    %v1008 = vmul.f32 %v1007, 0.6931472
    %v1009 = vsub.f32 %v1001, %v1008
    %1010 = vst.msk [vmem:[#allocation5] sm:$0xff] %vm997, %v1009
    // Predicated region
    $region26: #{net_forward_pallas.1} parent=1 // pred_check
      _
    $region27: #{net_forward_pallas.1} parent=1 // pred_check_branch
      %1012 = sbr.rel (0) target = $region29
    $region28: #{net_forward_pallas.1} parent=1 // pred_region
      %s1014 = ssub.s32 128, 128
      %1015 = vsyncadd [#allocation4], %s1014
      %s1017 = sshll.u32 [#allocation5], 4
      %s1018 = int_to_ptr.vmem [resolvable:$true] %s1017
      %1020 = dma.vmem_to_hbm [thread:$0]  %s1018, 128, %s5, [#allocation4]
    $region29: #{net_forward_pallas.1} parent=1 // pred_fallthru
      _
    // Predicated region
    $region30: #{net_forward_pallas.1} parent=1 // pred_check
      _
    $region31: #{net_forward_pallas.1} parent=1 // pred_check_branch
      %1022 = sbr.rel (0) target = $region33
    $region32: #{net_forward_pallas.1} parent=1 // pred_region
      %1023 = dma.done [#allocation4], 128
    $region33: #{net_forward_pallas.1} parent=1 // pred_fallthru
      _
    %1024 = vsyncpa [#allocation3], 1
    %1025 = vsyncpa [#allocation4], 1

</llo_original>
